<compile_context>
chip_gen: v6e
topology: v6e:2x2x1
jax: 0.10.0
libtpu: 0.0.40
codegen_flags: <defaults>
</compile_context>

<pallas_src>
import jax
import jax.numpy as jnp
from jax.experimental import pallas as pl
from jax.experimental.pallas import tpu as pltpu


def _round_up(n, m):
    return ((n + m - 1) // m) * m


def _pick_batch_tile(batch):
    """Lane-dense batch tile: multiple of 128, >= ~1024 lanes when possible,
    aiming for >= 8 grid steps, capped at 64K lanes (v7x-safe)."""
    target_steps = 8
    max_tile = 64 * 1024          # 64K lanes * 16 feats * 2B = 2 MiB bf16 x / step
    min_tile = 1024
    bp128 = _round_up(batch, 128)
    tile = _round_up(-(-bp128 // target_steps), 128)   # ceil-div then round to 128
    tile = max(tile, min_tile)
    tile = min(tile, max_tile, bp128)
    return tile


def mlp_kernel(x_ref, w1_ref, b1_ref, w2_ref, b2_ref, w3_ref, b3_ref, o_ref):
    # x_ref: (TB, F) in compute dtype, batch on sublanes.  One in-kernel
    # transpose (f32 XLU path -- most robust lowering) puts batch on the
    # 128-lane axis; everything downstream is lane-dense.
    xt = jnp.transpose(x_ref[...].astype(jnp.float32))          # (F, TB) f32
    xt = xt.astype(w1_ref.dtype)                                 # bf16 for single-pass MXU

    # fc1: (7, F) @ (F, TB) -> (7, TB), f32 accumulation.
    h1 = jnp.dot(w1_ref[...], xt, preferred_element_type=jnp.float32)
    h1 = jnp.maximum(h1 + b1_ref[...], 0.0)

    # fc2: (20, 7) @ (7, TB) -> (20, TB).
    h2 = jnp.dot(w2_ref[...], h1.astype(w2_ref.dtype),
                 preferred_element_type=jnp.float32)
    h2 = jnp.maximum(h2 + b2_ref[...], 0.0)

    # fc3: (1, 20) @ (20, TB) -> (1, TB).
    z = jnp.dot(w3_ref[...], h2.astype(w3_ref.dtype),
                preferred_element_type=jnp.float32)
    z = z + b3_ref[...]

    # Lane-dense (1, TB) store -> unmasked vst / full-width DMA writeback
    # (masked only on the ragged final block).
    o_ref[...] = (jax.nn.sigmoid(z) * 0.8 + 0.1).astype(o_ref.dtype)
    # TODO(synk): if bundle dumps show MXU pop cadence (not the x DMA) bounds the
    # step on the 256-wide v6e/v7x MXUs, replace the three skinny dots with VPU
    # broadcast-FMA over an (F, TB//128, 128) view of x using SMEM scalar weights.
    # TODO(synk): v7x-only, accuracy permitting: feed x as fp8 for another 2x
    # input-bandwidth cut (keep f32 accumulation).


def net_forward(x, params, *, batch_tile=None, compute_dtype=jnp.bfloat16,
                vmem_limit_bytes=48 * 1024 * 1024):
    """x: (B, n_features) float32.  params: PyTorch-layout weights
    w1:(7,F) b1:(7,1) w2:(20,7) b2:(20,7->1)... biases as (out, 1).
    Returns (B, 1) float32."""
    B, F = x.shape
    w1, b1 = params["w1"], params["b1"]
    w2, b2 = params["w2"], params["b2"]
    w3, b3 = params["w3"], params["b3"]

    if batch_tile is None:
        batch_tile = _pick_batch_tile(B)
    assert batch_tile % 128 == 0, "batch_tile must be a multiple of 128 (lane-dense)"

    grid = (pl.cdiv(B, batch_tile),)

    # Boundary casts only -- no transpose, no pad, no extra layout pass over x.
    x_in = x.astype(compute_dtype)
    w1c = w1.astype(compute_dtype)
    w2c = w2.astype(compute_dtype)
    w3c = w3.astype(compute_dtype)
    # Biases stay f32: they are added to the f32 accumulators.

    # Advisory cost: cheap, HBM-bandwidth-bound custom call.
    flops = 2 * B * (F * 7 + 7 * 20 + 20 * 1) + 6 * B
    bytes_accessed = (
        x_in.size * x_in.dtype.itemsize
        + B * 4  # output
        + sum(p.size * p.dtype.itemsize for p in (w1c, b1, w2c, b2, w3c, b3))
    )
    cost = pl.CostEstimate(flops=flops, transcendentals=B,
                           bytes_accessed=bytes_accessed)

    # Tiny weights/biases: full arrays, resident in VMEM for every grid step.
    full = lambda arr: pl.BlockSpec(arr.shape, lambda i: (0, 0))

    out = pl.pallas_call(
        mlp_kernel,
        out_shape=jax.ShapeDtypeStruct((1, B), jnp.float32),
        grid_spec=pltpu.PrefetchScalarGridSpec(
            num_scalar_prefetch=0,
            grid=grid,
            in_specs=[
                # x tile (batch_tile, F): batch blocked, features full-extent.
                # NOTE: if profiling still shows exposed DMA waits at step
                # boundaries, add pipeline_mode=pl.Buffered(3) here (cheap: the
                # x tile is only ~2 MiB).
                pl.BlockSpec((batch_tile, F), lambda i: (i, 0)),
                full(w1c), full(b1),
                full(w2c), full(b2),
                full(w3c), full(b3),
            ],
            out_specs=pl.BlockSpec((1, batch_tile), lambda i: (0, i)),
        ),
        compiler_params=pltpu.CompilerParams(
            dimension_semantics=("parallel",),   # megacore-shardable on v7x
            # Generation-safe (<64 MiB v7x physical).  On v5e/v6e (128 MiB VMEM)
            # this can be raised alongside a larger batch_tile.
            vmem_limit_bytes=vmem_limit_bytes,
        ),
        cost_estimate=cost,
    )(x_in, w1c, b1, w2c, b2, w3c, b3)

    # (1, B) lane-dense slab -> (B, 1) expected by the PyTorch-style caller.
    return out.reshape(B, 1)


def init_params(key, n_features):
    """Deterministic init mimicking PyTorch nn.Linear defaults
    (uniform(-1/sqrt(fan_in), 1/sqrt(fan_in))).  Weights in PyTorch (out, in)
    layout; biases as (out, 1)."""
    def linear(key, fan_in, fan_out):
        kw, kb = jax.random.split(key)
        bound = 1.0 / (float(fan_in) ** 0.5)
        w = jax.random.uniform(kw, (fan_out, fan_in), jnp.float32, -bound, bound)
        b = jax.random.uniform(kb, (fan_out, 1), jnp.float32, -bound, bound)
        return w, b

    k1, k2, k3 = jax.random.split(key, 3)
    w1, b1 = linear(k1, n_features, 7)
    w2, b2 = linear(k2, 7, 20)
    w3, b3 = linear(k3, 20, 1)
    return {"w1": w1, "b1": b1, "w2": w2, "b2": b2, "w3": w3, "b3": b3}


def net_reference(x, params):
    """Pure-JAX f32 reference (standard (batch, features) math)."""
    h1 = jnp.maximum(x @ params["w1"].T + params["b1"].T, 0.0)
    h2 = jnp.maximum(h1 @ params["w2"].T + params["b2"].T, 0.0)
    return jax.nn.sigmoid(h2 @ params["w3"].T + params["b3"].T) * 0.8 + 0.1


if __name__ == "__main__":
    key = jax.random.PRNGKey(0)
    k_x, k_p = jax.random.split(key)

    # Small demo: n_features=16, batch not a multiple of 128 to exercise the
    # ragged-last-tile path; batch_tile=128 -> 2-step grid (pipelining path).
    B, F = 200, 16
    x = jax.random.normal(k_x, (B, F), dtype=jnp.float32)
    params = init_params(k_p, F)

    out = net_forward(x, params, batch_tile=128)
    out = jax.block_until_ready(out)

    ref = net_reference(x, params)
    assert out.shape == (B, 1)
    # bf16 inputs / f32 accumulation: compare against the f32 reference with a
    # bf16-appropriate tolerance (output range is [0.1, 0.9]).
    assert jnp.allclose(out, ref, atol=3e-2, rtol=0.0), (
        float(jnp.max(jnp.abs(out - ref)))
    )

    # Also check the full-precision path matches tightly.
    out_f32 = jax.block_until_ready(
        net_forward(x, params, batch_tile=128, compute_dtype=jnp.float32))
    assert jnp.allclose(out_f32, ref, atol=1e-5, rtol=1e-5)

    print("KERNEL_OK")
</pallas_src>

<mosaic_0001>
module attributes {stable_mosaic.version = 11 : i64} {
  func.func @mlp_kernel(%arg0: i32, %arg1: memref<128x16xbf16, #tpu.memory_space<vmem>>, %arg2: memref<7x16xbf16, #tpu.memory_space<vmem>>, %arg3: memref<7x1xf32, #tpu.memory_space<vmem>>, %arg4: memref<20x7xbf16, #tpu.memory_space<vmem>>, %arg5: memref<20x1xf32, #tpu.memory_space<vmem>>, %arg6: memref<1x20xbf16, #tpu.memory_space<vmem>>, %arg7: memref<1x1xf32, #tpu.memory_space<vmem>>, %arg8: memref<1x128xf32, #tpu.memory_space<vmem>>) attributes {dimension_semantics = [#tpu.dimension_semantics<parallel>], iteration_bounds = array<i64: 2>, scalar_prefetch = 0 : i64, scratch_operands = 0 : i64, tpu.core_type = #tpu.core_type<tc>, window_params = [{transform_indices = @transform_0, window_bounds = array<i64: 128, 16>}, {pipeline_mode = #tpu.pipeline_mode<synchronous>, transform_indices = @transform_1, window_bounds = array<i64: 7, 16>}, {pipeline_mode = #tpu.pipeline_mode<synchronous>, transform_indices = @transform_2, window_bounds = array<i64: 7, 1>}, {pipeline_mode = #tpu.pipeline_mode<synchronous>, transform_indices = @transform_3, window_bounds = array<i64: 20, 7>}, {pipeline_mode = #tpu.pipeline_mode<synchronous>, transform_indices = @transform_4, window_bounds = array<i64: 20, 1>}, {pipeline_mode = #tpu.pipeline_mode<synchronous>, transform_indices = @transform_5, window_bounds = array<i64: 1, 20>}, {pipeline_mode = #tpu.pipeline_mode<synchronous>, transform_indices = @transform_6, window_bounds = array<i64: 1, 1>}, {transform_indices = @transform_7, window_bounds = array<i64: 1, 128>}]} {
    %c0 = arith.constant 0 : index
    %c0_0 = arith.constant 0 : index
    %0 = vector.load %arg1[%c0, %c0_0] : memref<128x16xbf16, #tpu.memory_space<vmem>>, vector<128x16xbf16>
    %1 = arith.extf %0 : vector<128x16xbf16> to vector<128x16xf32>
    %2 = tpu.transpose %1, [1, 0] : vector<128x16xf32> -> vector<16x128xf32>
    %3 = arith.truncf %2 : vector<16x128xf32> to vector<16x128xbf16>
    %c0_1 = arith.constant 0 : index
    %c0_2 = arith.constant 0 : index
    %4 = vector.load %arg2[%c0_1, %c0_2] : memref<7x16xbf16, #tpu.memory_space<vmem>>, vector<7x16xbf16>
    %cst = arith.constant dense<0.000000e+00> : vector<7x128xf32>
    %5 = tpu.matmul %4, %3, %cst {dimension_numbers = #tpu.dot_dimension_numbers<[1], [0], [0], [1], [0, 0, 1, 1], [], []>} : vector<7x16xbf16>, vector<16x128xbf16>, vector<7x128xf32> -> vector<7x128xf32>
    %c0_3 = arith.constant 0 : index
    %c0_4 = arith.constant 0 : index
    %6 = vector.load %arg3[%c0_3, %c0_4] : memref<7x1xf32, #tpu.memory_space<vmem>>, vector<7x1xf32>
    %7 = vector.broadcast %6 : vector<7x1xf32> to vector<7x128xf32>
    %8 = arith.addf %5, %7 : vector<7x128xf32>
    %cst_5 = arith.constant 0.000000e+00 : f32
    %9 = vector.broadcast %cst_5 : f32 to vector<7x128xf32>
    %10 = arith.maximumf %8, %9 : vector<7x128xf32>
    %c0_6 = arith.constant 0 : index
    %c0_7 = arith.constant 0 : index
    %11 = vector.load %arg4[%c0_6, %c0_7] : memref<20x7xbf16, #tpu.memory_space<vmem>>, vector<20x7xbf16>
    %12 = arith.truncf %10 : vector<7x128xf32> to vector<7x128xbf16>
    %cst_8 = arith.constant dense<0.000000e+00> : vector<20x128xf32>
    %13 = tpu.matmul %11, %12, %cst_8 {dimension_numbers = #tpu.dot_dimension_numbers<[1], [0], [0], [1], [0, 0, 1, 1], [], []>} : vector<20x7xbf16>, vector<7x128xbf16>, vector<20x128xf32> -> vector<20x128xf32>
    %c0_9 = arith.constant 0 : index
    %c0_10 = arith.constant 0 : index
    %14 = vector.load %arg5[%c0_9, %c0_10] : memref<20x1xf32, #tpu.memory_space<vmem>>, vector<20x1xf32>
    %15 = vector.broadcast %14 : vector<20x1xf32> to vector<20x128xf32>
    %16 = arith.addf %13, %15 : vector<20x128xf32>
    %cst_11 = arith.constant 0.000000e+00 : f32
    %17 = vector.broadcast %cst_11 : f32 to vector<20x128xf32>
    %18 = arith.maximumf %16, %17 : vector<20x128xf32>
    %c0_12 = arith.constant 0 : index
    %c0_13 = arith.constant 0 : index
    %19 = vector.load %arg6[%c0_12, %c0_13] : memref<1x20xbf16, #tpu.memory_space<vmem>>, vector<1x20xbf16>
    %20 = arith.truncf %18 : vector<20x128xf32> to vector<20x128xbf16>
    %cst_14 = arith.constant dense<0.000000e+00> : vector<1x128xf32>
    %21 = tpu.matmul %19, %20, %cst_14 {dimension_numbers = #tpu.dot_dimension_numbers<[1], [0], [0], [1], [0, 0, 1, 1], [], []>} : vector<1x20xbf16>, vector<20x128xbf16>, vector<1x128xf32> -> vector<1x128xf32>
    %c0_15 = arith.constant 0 : index
    %c0_16 = arith.constant 0 : index
    %22 = vector.load %arg7[%c0_15, %c0_16] : memref<1x1xf32, #tpu.memory_space<vmem>>, vector<1x1xf32>
    %23 = vector.broadcast %22 : vector<1x1xf32> to vector<1x128xf32>
    %24 = arith.addf %21, %23 : vector<1x128xf32>
    %25 = arith.negf %24 : vector<1x128xf32>
    %26 = math.exp %25 : vector<1x128xf32>
    %cst_17 = arith.constant 1.000000e+00 : f32
    %27 = vector.broadcast %cst_17 : f32 to vector<1x128xf32>
    %28 = arith.addf %27, %26 : vector<1x128xf32>
    %29 = arith.divf %27, %28 : vector<1x128xf32>
    %cst_18 = arith.constant 8.000000e-01 : f32
    %30 = vector.broadcast %cst_18 : f32 to vector<1x128xf32>
    %31 = arith.mulf %29, %30 : vector<1x128xf32>
    %cst_19 = arith.constant 1.000000e-01 : f32
    %32 = vector.broadcast %cst_19 : f32 to vector<1x128xf32>
    %33 = arith.addf %31, %32 : vector<1x128xf32>
    %c0_20 = arith.constant 0 : index
    %c0_21 = arith.constant 0 : index
    %34 = vector.load %arg8[%c0_20, %c0_21] : memref<1x128xf32, #tpu.memory_space<vmem>>, vector<1x128xf32>
    tpu.vector_store %arg8[%c0_20, %c0_21], %33 {strides = array<i32>} : memref<1x128xf32, #tpu.memory_space<vmem>>, vector<1x128xf32>,
    return
  }
  func.func @transform_0(%arg0: i32) -> (i32, i32) {
    %c0_i32 = arith.constant 0 : i32
    %c0_i32_0 = arith.constant 0 : i32
    return %arg0, %c0_i32 : i32, i32
  }
  func.func @transform_1(%arg0: i32) -> (i32, i32) {
    %c0_i32 = arith.constant 0 : i32
    %c0_i32_0 = arith.constant 0 : i32
    %c0_i32_1 = arith.constant 0 : i32
    return %c0_i32, %c0_i32_0 : i32, i32
  }
  func.func @transform_2(%arg0: i32) -> (i32, i32) {
    %c0_i32 = arith.constant 0 : i32
    %c0_i32_0 = arith.constant 0 : i32
    %c0_i32_1 = arith.constant 0 : i32
    return %c0_i32, %c0_i32_0 : i32, i32
  }
  func.func @transform_3(%arg0: i32) -> (i32, i32) {
    %c0_i32 = arith.constant 0 : i32
    %c0_i32_0 = arith.constant 0 : i32
    %c0_i32_1 = arith.constant 0 : i32
    return %c0_i32, %c0_i32_0 : i32, i32
  }
  func.func @transform_4(%arg0: i32) -> (i32, i32) {
    %c0_i32 = arith.constant 0 : i32
    %c0_i32_0 = arith.constant 0 : i32
    %c0_i32_1 = arith.constant 0 : i32
    return %c0_i32, %c0_i32_0 : i32, i32
  }
  func.func @transform_5(%arg0: i32) -> (i32, i32) {
    %c0_i32 = arith.constant 0 : i32
    %c0_i32_0 = arith.constant 0 : i32
    %c0_i32_1 = arith.constant 0 : i32
    return %c0_i32, %c0_i32_0 : i32, i32
  }
  func.func @transform_6(%arg0: i32) -> (i32, i32) {
    %c0_i32 = arith.constant 0 : i32
    %c0_i32_0 = arith.constant 0 : i32
    %c0_i32_1 = arith.constant 0 : i32
    return %c0_i32, %c0_i32_0 : i32, i32
  }
  func.func @transform_7(%arg0: i32) -> (i32, i32) {
    %c0_i32 = arith.constant 0 : i32
    %c0_i32_0 = arith.constant 0 : i32
    return %c0_i32, %arg0 : i32, i32
  }
}

</mosaic_0001>

<llo_original>
// kernel: tpu_custom_call.1
$region0: #{tpu_custom_call.1}
  #allocation0 [shape = 'u32[]', space=smem, size = 0x4, offset = 0x4, fixed_abs, tag = 'smem constant byte address 0x4 - core index']
  #allocation1 [shape = 'u32[144,128]{1,0:T(1,128)}', space=vmem, size = 0x12000, scoped, tag = 'internal scratch']
  #allocation2 [shape = 'f32[1,1]{1,0:T(1,128)S(1)}', space=vmem, size = 0x200, scoped, tag = 'scoped memory for tpu_custom_call.1']
  %s0 = inlined_call_operand.vmem [shape: bf16[200,16], index: 0, kind: input, shape index: {}]
  %s1 = inlined_call_operand.vmem [shape: bf16[7,16], index: 1, kind: input, shape index: {}]
  %s2 = inlined_call_operand.vmem [shape: f32[7,1], index: 2, kind: input, shape index: {}]
  %s3 = inlined_call_operand.vmem [shape: bf16[20,7], index: 3, kind: input, shape index: {}]
  %s4 = inlined_call_operand.vmem [shape: f32[20,1], index: 4, kind: input, shape index: {}]
  %s5 = inlined_call_operand.vmem [shape: bf16[1,20], index: 5, kind: input, shape index: {}]
  %s6 = inlined_call_operand.<no memory space> [shape: f32[1,1], index: 6, kind: input, shape index: {}]
  %s7 = inlined_call_operand.hbm [shape: f32[1,200], index: 7, kind: output, shape index: {}]
  %s8 = sld [smem:[#allocation0]]
  $region61: #{tpu_custom_call.1} parent=0
    _
  %s10 = ssub.s32 1, %s8
  %s11 = scalar_select 0, %s10, %s8
  %v12 = vstv %s6
  %13 = vst [vmem:[#allocation2] sm:$0x1] %v12
  $region1: #{tpu_custom_call.1} parent=0
    #allocation3 [shape = 'u8[1024]{0}', space=vmem, size = 0x400, scoped, tag = 'output window, operand 0']
    #allocation4 [shape = 's32[2]{0}', space=sflag, size = 0x8, scoped, tag = 'scoped memory for tpu_custom_call.1']
    %14 = vsyncpa [#allocation4], 0
    %s15 = scalar_lea.sflag [#allocation4], 1
    %16 = vsyncpa %s15, 0
    loop: start=0, step=1, limit=4
    $region2: #{tpu_custom_call.1} parent=1 // loop_pre_header
      _
    $region3: #{tpu_custom_call.1} parent=1 // loop_header
      %s18 = sphi 0, %s22
      %p19 = scmp.ge.s32.totalorder %s18, 4
      %s28 = sphi 0, %s30
      %s31 = sphi 0, %s28
      %s32 = sphi 0, %s31
      %s48 = sphi 0, %s32
      %s52 = sphi 0, %s52
      %s54 = sphi 0, %s52
      %s55 = sphi 0, %s54
      %s69 = sphi 0, %s55
      %s73 = sphi 0, %s73
      %s75 = sphi 0, %s73
      %s76 = sphi 0, %s75
      %s90 = sphi 0, %s76
      %s94 = sphi 0, %s94
      %s96 = sphi 0, %s94
      %s97 = sphi 0, %s96
      %s111 = sphi 0, %s97
      %s115 = sphi 0, %s115
      %s117 = sphi 0, %s115
      %s118 = sphi 0, %s117
      %s132 = sphi 0, %s118
      %s136 = sphi 0, %s136
      %s138 = sphi 0, %s136
      %s139 = sphi 0, %s138
      %s153 = sphi 0, %s139
      %s157 = sphi 0, %s157
      %s159 = sphi 0, %s157
      %s160 = sphi 0, %s159
      %s174 = sphi 0, %s160
      %s180 = sphi 0, %s182
      %s183 = sphi 0, %s180
      %s184 = sphi 0, %s183
      %s200 = sphi 0, %s184
    $region4: #{tpu_custom_call.1} parent=1 // loop_header_branch
      %21 = sbr.rel (%p19) target = $region8
    $region5: #{tpu_custom_call.1} parent=1 // loop_body
      %s23 = ssub.s32 %s18, 1
      %s24 = ssub.s32 %s18, 2
      %s25 = sadd.s32 %s18, 1
      %s26 = ssub.s32 %s18, %s25
      %p27 = scmp.eq.s32.totalorder %s26, 0
      %s29 = sadd.s32 %s28, 1
      %s30 = scalar_select %p27, %s28, %s29
      %p33 = pneg %p27
      %p34 = scmp.eq.s32.totalorder %s18, 1
      %p35 = por %p33, %p34
      %p36 = scmp.ne.s32.totalorder %s28, %s31
      %p37 = scmp.eq.s32.totalorder %s18, 0
      %p38 = por %p36, %p37
      %p39 = scmp.ne.s32.totalorder %s28, %s31
      %p40 = scmp.eq.s32.totalorder %s23, 1
      %p41 = por %p39, %p40
      %p42 = scmp.ne.s32.totalorder %s31, %s32
      %p43 = scmp.eq.s32.totalorder %s23, 0
      %p44 = por %p42, %p43
      %p45 = scmp.ne.s32.totalorder %s31, %s32
      %p46 = scmp.eq.s32.totalorder %s24, 1
      %p47 = por %p45, %p46
      %p49 = scmp.ne.s32.totalorder %s32, %s48
      %p50 = scmp.eq.s32.totalorder %s24, 0
      %p51 = por %p49, %p50
      %s53 = sadd.s32 %s52, 1
      %p56 = scmp.eq.s32.totalorder %s18, 1
      %p57 = scmp.ne.s32.totalorder %s52, %s54
      %p58 = scmp.eq.s32.totalorder %s18, 0
      %p59 = por %p57, %p58
      %p60 = scmp.ne.s32.totalorder %s52, %s54
      %p61 = scmp.eq.s32.totalorder %s23, 1
      %p62 = por %p60, %p61
      %p63 = scmp.ne.s32.totalorder %s54, %s55
      %p64 = scmp.eq.s32.totalorder %s23, 0
      %p65 = por %p63, %p64
      %p66 = scmp.ne.s32.totalorder %s54, %s55
      %p67 = scmp.eq.s32.totalorder %s24, 1
      %p68 = por %p66, %p67
      %p70 = scmp.ne.s32.totalorder %s55, %s69
      %p71 = scmp.eq.s32.totalorder %s24, 0
      %p72 = por %p70, %p71
      %s74 = sadd.s32 %s73, 1
      %p77 = scmp.eq.s32.totalorder %s18, 1
      %p78 = scmp.ne.s32.totalorder %s73, %s75
      %p79 = scmp.eq.s32.totalorder %s18, 0
      %p80 = por %p78, %p79
      %p81 = scmp.ne.s32.totalorder %s73, %s75
      %p82 = scmp.eq.s32.totalorder %s23, 1
      %p83 = por %p81, %p82
      %p84 = scmp.ne.s32.totalorder %s75, %s76
      %p85 = scmp.eq.s32.totalorder %s23, 0
      %p86 = por %p84, %p85
      %p87 = scmp.ne.s32.totalorder %s75, %s76
      %p88 = scmp.eq.s32.totalorder %s24, 1
      %p89 = por %p87, %p88
      %p91 = scmp.ne.s32.totalorder %s76, %s90
      %p92 = scmp.eq.s32.totalorder %s24, 0
      %p93 = por %p91, %p92
      %s95 = sadd.s32 %s94, 1
      %p98 = scmp.eq.s32.totalorder %s18, 1
      %p99 = scmp.ne.s32.totalorder %s94, %s96
      %p100 = scmp.eq.s32.totalorder %s18, 0
      %p101 = por %p99, %p100
      %p102 = scmp.ne.s32.totalorder %s94, %s96
      %p103 = scmp.eq.s32.totalorder %s23, 1
      %p104 = por %p102, %p103
      %p105 = scmp.ne.s32.totalorder %s96, %s97
      %p106 = scmp.eq.s32.totalorder %s23, 0
      %p107 = por %p105, %p106
      %p108 = scmp.ne.s32.totalorder %s96, %s97
      %p109 = scmp.eq.s32.totalorder %s24, 1
      %p110 = por %p108, %p109
      %p112 = scmp.ne.s32.totalorder %s97, %s111
      %p113 = scmp.eq.s32.totalorder %s24, 0
      %p114 = por %p112, %p113
      %s116 = sadd.s32 %s115, 1
      %p119 = scmp.eq.s32.totalorder %s18, 1
      %p120 = scmp.ne.s32.totalorder %s115, %s117
      %p121 = scmp.eq.s32.totalorder %s18, 0
      %p122 = por %p120, %p121
      %p123 = scmp.ne.s32.totalorder %s115, %s117
      %p124 = scmp.eq.s32.totalorder %s23, 1
      %p125 = por %p123, %p124
      %p126 = scmp.ne.s32.totalorder %s117, %s118
      %p127 = scmp.eq.s32.totalorder %s23, 0
      %p128 = por %p126, %p127
      %p129 = scmp.ne.s32.totalorder %s117, %s118
      %p130 = scmp.eq.s32.totalorder %s24, 1
      %p131 = por %p129, %p130
      %p133 = scmp.ne.s32.totalorder %s118, %s132
      %p134 = scmp.eq.s32.totalorder %s24, 0
      %p135 = por %p133, %p134
      %s137 = sadd.s32 %s136, 1
      %p140 = scmp.eq.s32.totalorder %s18, 1
      %p141 = scmp.ne.s32.totalorder %s136, %s138
      %p142 = scmp.eq.s32.totalorder %s18, 0
      %p143 = por %p141, %p142
      %p144 = scmp.ne.s32.totalorder %s136, %s138
      %p145 = scmp.eq.s32.totalorder %s23, 1
      %p146 = por %p144, %p145
      %p147 = scmp.ne.s32.totalorder %s138, %s139
      %p148 = scmp.eq.s32.totalorder %s23, 0
      %p149 = por %p147, %p148
      %p150 = scmp.ne.s32.totalorder %s138, %s139
      %p151 = scmp.eq.s32.totalorder %s24, 1
      %p152 = por %p150, %p151
      %p154 = scmp.ne.s32.totalorder %s139, %s153
      %p155 = scmp.eq.s32.totalorder %s24, 0
      %p156 = por %p154, %p155
      %s158 = sadd.s32 %s157, 1
      %p161 = scmp.eq.s32.totalorder %s18, 1
      %p162 = scmp.ne.s32.totalorder %s157, %s159
      %p163 = scmp.eq.s32.totalorder %s18, 0
      %p164 = por %p162, %p163
      %p165 = scmp.ne.s32.totalorder %s157, %s159
      %p166 = scmp.eq.s32.totalorder %s23, 1
      %p167 = por %p165, %p166
      %p168 = scmp.ne.s32.totalorder %s159, %s160
      %p169 = scmp.eq.s32.totalorder %s23, 0
      %p170 = por %p168, %p169
      %p171 = scmp.ne.s32.totalorder %s159, %s160
      %p172 = scmp.eq.s32.totalorder %s24, 1
      %p173 = por %p171, %p172
      %p175 = scmp.ne.s32.totalorder %s160, %s174
      %p176 = scmp.eq.s32.totalorder %s24, 0
      %p177 = por %p175, %p176
      %s178 = ssub.s32 %s18, %s25
      %p179 = scmp.eq.s32.totalorder %s178, 0
      %s181 = sadd.s32 %s180, 1
      %s182 = scalar_select %p179, %s180, %s181
      %p185 = pneg %p179
      %p186 = scmp.eq.s32.totalorder %s18, 1
      %p187 = por %p185, %p186
      %p188 = scmp.ne.s32.totalorder %s180, %s183
      %p189 = scmp.eq.s32.totalorder %s18, 0
      %p190 = por %p188, %p189
      %p191 = scmp.ne.s32.totalorder %s180, %s183
      %p192 = scmp.eq.s32.totalorder %s23, 1
      %p193 = por %p191, %p192
      %p194 = scmp.ne.s32.totalorder %s183, %s184
      %p195 = scmp.eq.s32.totalorder %s23, 0
      %p196 = por %p194, %p195
      %p197 = scmp.ne.s32.totalorder %s183, %s184
      %p198 = scmp.eq.s32.totalorder %s24, 1
      %p199 = por %p197, %p198
      %p201 = scmp.ne.s32.totalorder %s184, %s200
      %p202 = scmp.eq.s32.totalorder %s24, 0
      %p203 = por %p201, %p202
      %p204 = scmp.le.s32.totalorder 1, %s18
      %p205 = scmp.lt.s32.totalorder %s18, 3
      %p206 = pnand %p204, %p205
      %p207 = pneg %p206
      // Predicated region
      $region9: #{tpu_custom_call.1} parent=5 // pred_check
        _
      $region10: #{tpu_custom_call.1} parent=5 // pred_check_branch
        %209 = sbr.rel (%p206) target = $region12
      $region11: #{tpu_custom_call.1} parent=5 // pred_region
        %s210 = ssub.s32 %s18, 1
        // Predicated region
        $region13: #{tpu_custom_call.1} parent=11 // pred_check
          %p211 = pneg %p65
        $region14: #{tpu_custom_call.1} parent=11 // pred_check_branch
          %213 = sbr.rel (%p211) target = $region16
        $region15: #{tpu_custom_call.1} parent=11 // pred_region
          _
        $region16: #{tpu_custom_call.1} parent=11 // pred_fallthru
          _
        // Predicated region
        $region17: #{tpu_custom_call.1} parent=11 // pred_check
          %p214 = pneg %p86
        $region18: #{tpu_custom_call.1} parent=11 // pred_check_branch
          %216 = sbr.rel (%p214) target = $region20
        $region19: #{tpu_custom_call.1} parent=11 // pred_region
          _
        $region20: #{tpu_custom_call.1} parent=11 // pred_fallthru
          _
        // Predicated region
        $region21: #{tpu_custom_call.1} parent=11 // pred_check
          %p217 = pneg %p107
        $region22: #{tpu_custom_call.1} parent=11 // pred_check_branch
          %219 = sbr.rel (%p217) target = $region24
        $region23: #{tpu_custom_call.1} parent=11 // pred_region
          _
        $region24: #{tpu_custom_call.1} parent=11 // pred_fallthru
          _
        // Predicated region
        $region25: #{tpu_custom_call.1} parent=11 // pred_check
          %p220 = pneg %p128
        $region26: #{tpu_custom_call.1} parent=11 // pred_check_branch
          %222 = sbr.rel (%p220) target = $region28
        $region27: #{tpu_custom_call.1} parent=11 // pred_region
          _
        $region28: #{tpu_custom_call.1} parent=11 // pred_fallthru
          _
        // Predicated region
        $region29: #{tpu_custom_call.1} parent=11 // pred_check
          %p223 = pneg %p149
        $region30: #{tpu_custom_call.1} parent=11 // pred_check_branch
          %225 = sbr.rel (%p223) target = $region32
        $region31: #{tpu_custom_call.1} parent=11 // pred_region
          _
        $region32: #{tpu_custom_call.1} parent=11 // pred_fallthru
          _
        // Predicated region
        $region33: #{tpu_custom_call.1} parent=11 // pred_check
          %p226 = pneg %p170
        $region34: #{tpu_custom_call.1} parent=11 // pred_check_branch
          %228 = sbr.rel (%p226) target = $region36
        $region35: #{tpu_custom_call.1} parent=11 // pred_region
          _
        $region36: #{tpu_custom_call.1} parent=11 // pred_fallthru
          _
      $region12: #{tpu_custom_call.1} parent=5 // pred_fallthru
        _
      %p229 = scmp.lt.s32.totalorder %s18, 2
      // Predicated region
      $region37: #{tpu_custom_call.1} parent=5 // pred_check
        %p230 = pneg %p229
      $region38: #{tpu_custom_call.1} parent=5 // pred_check_branch
        %232 = sbr.rel (%p230) target = $region40
      $region39: #{tpu_custom_call.1} parent=5 // pred_region
        // Predicated region
        $region41: #{tpu_custom_call.1} parent=39 // pred_check
          %p233 = pneg %p38
        $region42: #{tpu_custom_call.1} parent=39 // pred_check_branch
          %235 = sbr.rel (%p233) target = $region44
        $region43: #{tpu_custom_call.1} parent=39 // pred_region
          %s236 = smul.u32 16, %s18
          %s237 = ssub.s32 25, %s236
          %p238 = scmp.lt.s32.totalorder %s237, 16
          %s239 = scalar_select %p238, %s237, 16
          %s240 = smul.u32 64, %s239
          %p241 = scmp.lt.s32.totalorder %s236, 24
          %s242 = scalar_select %p241, %s236, 24
          %s243 = smul.addr %s242, 4
          %s244 = scalar_lea.vmem %s0, %s243
          %s245 = smul.u32 16, %s18
          %s246 = ssub.s32 25, %s245
          %p247 = scmp.lt.s32.totalorder %s246, 16
          %s248 = scalar_select %p247, %s246, 16
          %s249 = smul.u32 64, %s248
        $region44: #{tpu_custom_call.1} parent=39 // pred_fallthru
          _
      $region40: #{tpu_custom_call.1} parent=5 // pred_fallthru
        _
      %p250 = scmp.le.s32.totalorder 1, %s18
      %p251 = scmp.lt.s32.totalorder %s18, 3
      %p252 = pnand %p250, %p251
      %p253 = pneg %p252
      // Predicated region
      $region45: #{tpu_custom_call.1} parent=5 // pred_check
        _
      $region46: #{tpu_custom_call.1} parent=5 // pred_check_branch
        %255 = sbr.rel (%p252) target = $region48
      $region47: #{tpu_custom_call.1} parent=5 // pred_region
        %s256 = ssub.s32 %s18, 1
        %s257 = smul.u32 16, %s23
        %s258 = ssub.s32 25, %s257
        %p259 = scmp.lt.s32.totalorder %s258, 16
        %s260 = scalar_select %p259, %s258, 16
        %s261 = smul.u32 64, %s260
        %p262 = scmp.lt.s32.totalorder %s257, 24
        %s263 = scalar_select %p262, %s257, 24
        %s264 = smul.addr %s263, 4
        %s265 = scalar_lea.vmem %s0, %s264
        %p266 = pneg %p44
        %p267 = pneg %p41
        %p268 = pneg %p65
        %p269 = pneg %p62
        %p270 = pneg %p86
        %p271 = pneg %p83
        %p272 = pneg %p107
        %p273 = pneg %p104
        %p274 = pneg %p128
        %p275 = pneg %p125
        %p276 = pneg %p149
        %p277 = pneg %p146
        %p278 = pneg %p170
        %p279 = pneg %p167
        %p280 = pneg %p196
        %p281 = pneg %p193
        %s282 = sand.u32 %s183, 1
        %s283 = scalar_lea.sflag [#allocation4], %s282
        %s284 = sand.u32 %s183, 1
        %s285 = scalar_lea.vmem [#allocation3], %s284
        %s286 = smul.u32 16, %s23
        %s287 = ssub.s32 25, %s286
        %p288 = scmp.lt.s32.totalorder %s287, 16
        %s289 = scalar_select %p288, %s287, 16
        %s290 = smul.u32 64, %s289
        %p291 = scmp.lt.s32.totalorder %s286, 24
        %s292 = scalar_select %p291, %s286, 24
        %s293 = smul.addr %s292, 4
        %s294 = scalar_lea.vmem %s0, %s293
        %s295 = smul.u32 16, %s23
        %s296 = ssub.s32 25, %s295
        %p297 = scmp.lt.s32.totalorder %s296, 16
        %s298 = scalar_select %p297, %s296, 16
        %s299 = smul.u32 64, %s298
        %v301 = vld [vmem:[%s294] sm:$0xf]
        %v302 = vld [vmem:[%s294 + $0x4] sm:$0xf]
        %v303 = vld [vmem:[%s294 + $0x8] sm:$0xf]
        %v304 = vld [vmem:[%s294 + $0xc] sm:$0xf]
        %v305 = vld [vmem:[%s294 + $0x10] sm:$0xf]
        %v306 = vld [vmem:[%s294 + $0x14] sm:$0xf]
        %v307 = vld [vmem:[%s294 + $0x18] sm:$0xf]
        %v308 = vld [vmem:[%s294 + $0x1c] sm:$0xf]
        %v309 = vld [vmem:[%s294 + $0x20] sm:$0xf]
        %v310 = vld [vmem:[%s294 + $0x24] sm:$0xf]
        %v311 = vld [vmem:[%s294 + $0x28] sm:$0xf]
        %v312 = vld [vmem:[%s294 + $0x2c] sm:$0xf]
        %v313 = vld [vmem:[%s294 + $0x30] sm:$0xf]
        %v314 = vld [vmem:[%s294 + $0x34] sm:$0xf]
        %v315 = vld [vmem:[%s294 + $0x38] sm:$0xf]
        %v316 = vld [vmem:[%s294 + $0x3c] sm:$0xf]
        %v317 = vunpack.c.l.bf16 %v301
        %v318 = vunpack.c.l.bf16 %v302
        %v319 = vunpack.c.l.bf16 %v303
        %v320 = vunpack.c.l.bf16 %v304
        %v321 = vunpack.c.l.bf16 %v305
        %v322 = vunpack.c.l.bf16 %v306
        %v323 = vunpack.c.l.bf16 %v307
        %v324 = vunpack.c.l.bf16 %v308
        %v325 = vunpack.c.l.bf16 %v309
        %v326 = vunpack.c.l.bf16 %v310
        %v327 = vunpack.c.l.bf16 %v311
        %v328 = vunpack.c.l.bf16 %v312
        %v329 = vunpack.c.l.bf16 %v313
        %v330 = vunpack.c.l.bf16 %v314
        %v331 = vunpack.c.l.bf16 %v315
        %v332 = vunpack.c.l.bf16 %v316
        %333 = vxpose.xlu0.b32.start [1/16] %v317, 128
        %334 = vxpose.xlu0.b32.cont [2/16] %v318, 128
        %335 = vxpose.xlu0.b32.cont [3/16] %v319, 128
        %336 = vxpose.xlu0.b32.cont [4/16] %v320, 128
        %337 = vxpose.xlu0.b32.cont [5/16] %v321, 128
        %338 = vxpose.xlu0.b32.cont [6/16] %v322, 128
        %339 = vxpose.xlu0.b32.cont [7/16] %v323, 128
        %340 = vxpose.xlu0.b32.cont [8/16] %v324, 128
        %341 = vxpose.xlu0.b32.cont [9/16] %v325, 128
        %342 = vxpose.xlu0.b32.cont [10/16] %v326, 128
        %343 = vxpose.xlu0.b32.cont [11/16] %v327, 128
        %344 = vxpose.xlu0.b32.cont [12/16] %v328, 128
        %345 = vxpose.xlu0.b32.cont [13/16] %v329, 128
        %346 = vxpose.xlu0.b32.cont [14/16] %v330, 128
        %347 = vxpose.xlu0.b32.cont [15/16] %v331, 128
        %348 = vxpose.xlu0.b32.end [16/16] %v332, 128
        %v349 = vpop.trf.xlu0
        %v350 = vpop.trf.xlu0
        %v351 = vpop.trf.xlu0
        %v352 = vpop.trf.xlu0
        %v353 = vpop.trf.xlu0
        %v354 = vpop.trf.xlu0
        %v355 = vpop.trf.xlu0
        %v356 = vpop.trf.xlu0
        %v357 = vpop.trf.xlu0
        %v358 = vpop.trf.xlu0
        %v359 = vpop.trf.xlu0
        %v360 = vpop.trf.xlu0
        %v361 = vpop.trf.xlu0
        %v362 = vpop.trf.xlu0
        %v363 = vpop.trf.xlu0
        %v364 = vpop.trf.xlu0
        %v365 = vpack.c.bf16 %v350, %v349
        %v366 = vld [vmem:[%s1] sm:$0xf]
        %v367 = vld [vmem:[%s2] sm:$0x7f]
        %369 = vset.pattern.permute.xlu0 0
        %370 = vperm.xlu0 %369, %v367
        %v371 = vpop.permute.xlu0 %370
        %vm373 = vcmask 130048
        %v375 = vsel %vm373, %v366, 0
        %377 = vmatprep.subr.bf16.mxu0 0
        %378 = vmatpush1.bf16.msra.mxu0 0
        %379 = vmatprep.subr.bf16.mxu0 0
        %380 = vmatpush1.bf16.msra.mxu0 0
        %381 = vmatprep.subr.bf16.mxu0 0
        %382 = vmatpush1.bf16.msra.mxu0 0
        %383 = vmatprep.subr.bf16.mxu0 0
        %384 = vmatpush1.bf16.msra.mxu0 0
        %385 = vmatprep.subr.bf16.mxu0 0
        %386 = vmatpush1.bf16.msra.mxu0 0
        %387 = vmatprep.subr.bf16.mxu0 0
        %388 = vmatpush1.bf16.msra.mxu0 0
        %389 = vmatprep.subr.bf16.mxu0 0
        %390 = vmatpush1.bf16.msra.mxu0 0
        %391 = vmatprep.subr.bf16.mxu0 0
        %392 = vmatpush1.bf16.msra.mxu0 %v365
        %393 = vmatprep.subr.bf16.mxu0 0
        %394 = vmatpush2.bf16.msra.mxu0 0
        %395 = vmatprep.subr.bf16.mxu0 0
        %396 = vmatpush2.bf16.msra.mxu0 0
        %397 = vmatprep.subr.bf16.mxu0 0
        %398 = vmatpush2.bf16.msra.mxu0 0
        %399 = vmatprep.subr.bf16.mxu0 0
        %400 = vmatpush2.bf16.msra.mxu0 0
        %401 = vmatprep.subr.bf16.mxu0 0
        %402 = vmatpush2.bf16.msra.mxu0 0
        %403 = vmatprep.subr.bf16.mxu0 0
        %404 = vmatpush2.bf16.msra.mxu0 0
        %405 = vmatprep.subr.bf16.mxu0 0
        %406 = vmatpush2.bf16.msra.mxu0 0
        %407 = vmatprep.subr.bf16.mxu0 0
        %408 = vmatpush2.bf16.msra.mxu0 0
        %409 = vmatprep.mubr.bf16.mxu0 0
        %410 = vmatmul.mubr.bf16.gmra.mxu0 %v375
        %v411 = vpop.f32.mrf.mxu0
        %v412 = vadd.f32 %v371, %v411
        %v413 = vpop.f32.mrf.mxu0
        %v414 = vpop.f32.mrf.mxu0
        %v415 = vpop.f32.mrf.mxu0
        %416 = vdwg.mxu0
        %v417 = vmax.f32 %v412, 0.0
        %v418 = vld [vmem:[%s3] sm:$0xf]
        %v419 = vld [vmem:[%s3 + $0x4] sm:$0xf]
        %v420 = vld [vmem:[%s3 + $0x8] sm:$0x3]
        %v421 = vpack.c.bf16 %v417, %v417
        %v422 = vld [vmem:[%s4] sm:$0xff]
        %v423 = vld [vmem:[%s4 + $0x8] sm:$0xff]
        %v424 = vld [vmem:[%s4 + $0x10] sm:$0xf]
        %426 = vset.pattern.permute.xlu0 0
        %427 = vperm.xlu0 %426, %v422
        %v428 = vpop.permute.xlu0 %427
        %431 = vset.pattern.permute.xlu0 0
        %432 = vperm.xlu0 %431, %v423
        %v433 = vpop.permute.xlu0 %432
        %436 = vset.pattern.permute.xlu0 0
        %437 = vperm.xlu0 %436, %v424
        %v438 = vpop.permute.xlu0 %437
        %v443 = vunpack.c.l.b16 %v418
        %v444 = vunpack.c.l.b16 %v419
        %v445 = vunpack.c.l.b16 %v420
        %v446 = vpack.c.b16 %v444, %v443
        %v447 = vpack.c.b16 %v445, %v445
        %vm448 = vcmask 56320
        %v450 = vsel %vm448, %v446, 0
        %v453 = vsel %vm448, %v447, 0
        %vm455 = vcmask 1042432
        %vm456 = vcmask 1043456
        %v457 = vsel %vm455, 4294967295, 65535
        %v458 = vsel %vm456, %v457, 0
        %v460 = vand.u32 %v421, %v458
        %462 = vmatprep.subr.bf16.mxu0 0
        %463 = vmatpush1.bf16.msra.mxu0 0
        %464 = vmatprep.subr.bf16.mxu0 0
        %465 = vmatpush1.bf16.msra.mxu0 0
        %466 = vmatprep.subr.bf16.mxu0 0
        %467 = vmatpush1.bf16.msra.mxu0 0
        %468 = vmatprep.subr.bf16.mxu0 0
        %469 = vmatpush1.bf16.msra.mxu0 0
        %470 = vmatprep.subr.bf16.mxu0 0
        %471 = vmatpush1.bf16.msra.mxu0 0
        %472 = vmatprep.subr.bf16.mxu0 0
        %473 = vmatpush1.bf16.msra.mxu0 0
        %474 = vmatprep.subr.bf16.mxu0 0
        %475 = vmatpush1.bf16.msra.mxu0 0
        %476 = vmatprep.subr.bf16.mxu0 0
        %477 = vmatpush1.bf16.msra.mxu0 %v460
        %478 = vmatprep.subr.bf16.mxu0 0
        %479 = vmatpush2.bf16.msra.mxu0 0
        %480 = vmatprep.subr.bf16.mxu0 0
        %481 = vmatpush2.bf16.msra.mxu0 0
        %482 = vmatprep.subr.bf16.mxu0 0
        %483 = vmatpush2.bf16.msra.mxu0 0
        %484 = vmatprep.subr.bf16.mxu0 0
        %485 = vmatpush2.bf16.msra.mxu0 0
        %486 = vmatprep.subr.bf16.mxu0 0
        %487 = vmatpush2.bf16.msra.mxu0 0
        %488 = vmatprep.subr.bf16.mxu0 0
        %489 = vmatpush2.bf16.msra.mxu0 0
        %490 = vmatprep.subr.bf16.mxu0 0
        %491 = vmatpush2.bf16.msra.mxu0 0
        %492 = vmatprep.subr.bf16.mxu0 0
        %493 = vmatpush2.bf16.msra.mxu0 0
        %494 = vmatprep.mubr.bf16.mxu0 0
        %495 = vmatmul.mubr.bf16.gmra.mxu0 %v450
        %v496 = vpop.f32.mrf.mxu0
        %v497 = vadd.f32 %v428, %v496
        %v498 = vpop.f32.mrf.mxu0
        %v499 = vpop.f32.mrf.mxu0
        %v500 = vadd.f32 %v433, %v499
        %v501 = vpop.f32.mrf.mxu0
        %502 = vmatprep.mubr.bf16.mxu0 0
        %503 = vmatmul.mubr.bf16.gmra.mxu0 %v453
        %v504 = vpop.f32.mrf.mxu0
        %v505 = vadd.f32 %v438, %v504
        %v506 = vpop.f32.mrf.mxu0
        %v507 = vpop.f32.mrf.mxu0
        %v508 = vpop.f32.mrf.mxu0
        %509 = vdwg.mxu0
        %v510 = vmax.f32 %v497, 0.0
        %v511 = vmax.f32 %v500, 0.0
        %v512 = vmax.f32 %v505, 0.0
        %v513 = vld [vmem:[%s5] sm:$0x1]
        %v514 = vpack.c.bf16 %v511, %v510
        %v515 = vpack.c.bf16 %v512, %v512
        %v516 = vld [vmem:[#allocation2] sm:$0x1]
        %518 = vset.pattern.permute.xlu0 0
        %519 = vperm.xlu0 %518, %v516
        %v520 = vpop.permute.xlu0 %519
        %v522 = vlaneseq
        %v523 = vshrl.u32 %v522, 7
        %v524 = vsub.s32 0, %v523
        %v525 = vrot.slane %v520, %v524
        %vm526 = vcmask 162816
        %v528 = vsel %vm526, %v513, 0
        %vm530 = vcmask 1041408
        %v532 = vsel %vm530, %v515, 0
        %534 = vmatprep.subr.bf16.mxu0 0
        %535 = vmatpush1.bf16.msra.mxu0 0
        %536 = vmatprep.subr.bf16.mxu0 0
        %537 = vmatpush1.bf16.msra.mxu0 0
        %538 = vmatprep.subr.bf16.mxu0 0
        %539 = vmatpush1.bf16.msra.mxu0 0
        %540 = vmatprep.subr.bf16.mxu0 0
        %541 = vmatpush1.bf16.msra.mxu0 0
        %542 = vmatprep.subr.bf16.mxu0 0
        %543 = vmatpush1.bf16.msra.mxu0 0
        %544 = vmatprep.subr.bf16.mxu0 0
        %545 = vmatpush1.bf16.msra.mxu0 0
        %546 = vmatprep.subr.bf16.mxu0 0
        %547 = vmatpush1.bf16.msra.mxu0 %v532
        %548 = vmatprep.subr.bf16.mxu0 0
        %549 = vmatpush1.bf16.msra.mxu0 %v514
        %550 = vmatprep.subr.bf16.mxu0 0
        %551 = vmatpush2.bf16.msra.mxu0 0
        %552 = vmatprep.subr.bf16.mxu0 0
        %553 = vmatpush2.bf16.msra.mxu0 0
        %554 = vmatprep.subr.bf16.mxu0 0
        %555 = vmatpush2.bf16.msra.mxu0 0
        %556 = vmatprep.subr.bf16.mxu0 0
        %557 = vmatpush2.bf16.msra.mxu0 0
        %558 = vmatprep.subr.bf16.mxu0 0
        %559 = vmatpush2.bf16.msra.mxu0 0
        %560 = vmatprep.subr.bf16.mxu0 0
        %561 = vmatpush2.bf16.msra.mxu0 0
        %562 = vmatprep.subr.bf16.mxu0 0
        %563 = vmatpush2.bf16.msra.mxu0 0
        %564 = vmatprep.subr.bf16.mxu0 0
        %565 = vmatpush2.bf16.msra.mxu0 0
        %566 = vmatprep.mubr.bf16.mxu0 0
        %567 = vmatmul.mubr.bf16.gmra.mxu0 %v528
        %v568 = vpop.f32.mrf.mxu0
        %v569 = vadd.f32 %v525, %v568
        %v570 = vpop.f32.mrf.mxu0
        %v571 = vpop.f32.mrf.mxu0
        %v572 = vpop.f32.mrf.mxu0
        %573 = vdwg.mxu0
        %v574 = vxor.u32 %v569, 2147483648
        %v575 = vmul.f32 %v574, 1.442695
        %v576 = vpow.pop %v575
        %v577 = vadd.f32 %v576, 1.0
        %v578 = vrcp.pop %v577
        %v579 = vmul.f32 1.0, %v578
        %v580 = vmul.f32 %v579, 0.8
        %v581 = vadd.f32 %v580, 0.1
        %582 = vst [vmem:[%s285] sm:$0x1] %v581
        %s583 = sand.u32 %s183, 1
        %s584 = scalar_lea.sflag [#allocation4], %s583
        %s585 = sand.u32 %s183, 1
        %s586 = scalar_lea.vmem [#allocation3], %s585
        // Predicated region
        $region49: #{tpu_custom_call.1} parent=47 // pred_check
          %p587 = pneg %p193
        $region50: #{tpu_custom_call.1} parent=47 // pred_check_branch
          %589 = sbr.rel (%p587) target = $region52
        $region51: #{tpu_custom_call.1} parent=47 // pred_region
          %s591 = ssub.s32 16, 16
          %592 = vsyncadd %s584, %s591
          %s593 = smul.addr %s23, 16
          %s594 = scalar_lea.hbm %s7, %s593
          %s596 = sshll.u32 %s586, 4
          %s597 = int_to_ptr.vmem [resolvable:$true] %s596
          %599 = dma.vmem_to_hbm [thread:$0]  %s597, 16, %s594, %s584
        $region52: #{tpu_custom_call.1} parent=47 // pred_fallthru
          _
      $region48: #{tpu_custom_call.1} parent=5 // pred_fallthru
        _
      %p600 = scmp.le.s32.totalorder 2, %s18
      // Predicated region
      $region53: #{tpu_custom_call.1} parent=5 // pred_check
        %p601 = pneg %p600
      $region54: #{tpu_custom_call.1} parent=5 // pred_check_branch
        %603 = sbr.rel (%p601) target = $region56
      $region55: #{tpu_custom_call.1} parent=5 // pred_region
        %s604 = ssub.s32 %s18, 2
        // Predicated region
        $region57: #{tpu_custom_call.1} parent=55 // pred_check
          %p605 = pneg %p199
        $region58: #{tpu_custom_call.1} parent=55 // pred_check_branch
          %607 = sbr.rel (%p605) target = $region60
        $region59: #{tpu_custom_call.1} parent=55 // pred_region
          %s608 = sand.u32 %s184, 1
          %s609 = scalar_lea.sflag [#allocation4], %s608
          %s610 = sand.u32 %s184, 1
          %s611 = scalar_lea.vmem [#allocation3], %s610
          %612 = dma.done %s609, 16
        $region60: #{tpu_custom_call.1} parent=55 // pred_fallthru
          _
      $region56: #{tpu_custom_call.1} parent=5 // pred_fallthru
        _
    $region6: #{tpu_custom_call.1} parent=1 // loop_footer
      %s22 = sadd.s32 1, %s18
    $region7: #{tpu_custom_call.1} parent=1 // loop_footer_branch
      %17 = sbr.rel target = $region3
    $region8: #{tpu_custom_call.1} parent=1 // loop_exit
      _
    %613 = vsyncpa [#allocation4], 1
    %s614 = scalar_lea.sflag [#allocation4], 1
    %615 = vsyncpa %s614, 1

</llo_original>
